<compile_context>
chip_gen: v6e
topology: v6e:2x2x1
jax: 0.10.0
libtpu: 0.0.40
codegen_flags: <defaults>
</compile_context>

<pallas_src>
import functools

import jax
import jax.numpy as jnp
from jax.experimental import pallas as pl
from jax.experimental.pallas import tpu as pltpu

BN_EPS = 1e-5  # PyTorch BatchNorm1d default


def cnn_pretrained_kernel(
    frames_ref,                       # (B, 1, Tt, C*H*W) — one time-block
    wb_ref,                           # (C, FEAT)   backbone stand-in projection
    w1_ref, b1_ref, g1_ref, be1_ref,  # fc1 (FEAT,H1), bn1 params (1,H1)
    w2_ref, b2_ref, g2_ref, be2_ref,  # fc2 (H1,H2),  bn2 params (1,H2)
    w3_ref, b3_ref,                   # fc3 (H2,E)
    out_ref,                          # (B, 1, Tt, E)
    *, C, HW,
):
    B, _, Tt, CHW = frames_ref.shape
    E = out_ref.shape[-1]

    def bn_relu(h, gamma, beta):
        # BatchNorm1d forward (training mode): per-timestep batch stats over B.
        # Rows of h are ordered b*Tt + tt.
        n = h.shape[-1]
        if Tt % 8 == 0:
            # Vreg-aligned sublane slices: no sublane-splitting reshape/relayout.
            blocks = [h[b * Tt:(b + 1) * Tt, :] for b in range(B)]
            mu = sum(blocks) / B
            var = sum((blk - mu) ** 2 for blk in blocks) / B
            scale = gamma * jax.lax.rsqrt(var + BN_EPS)
            shift = beta - mu * scale
            return jnp.concatenate(
                [jnp.maximum(blk * scale + shift, 0.0) for blk in blocks], axis=0)
        else:
            # Fallback (e.g. time_blocks=2 -> Tt=4): proven reshape path.
            h3 = h.reshape(B, Tt, n)
            mu = jnp.mean(h3, axis=0, keepdims=True)
            var = jnp.mean((h3 - mu) ** 2, axis=0, keepdims=True)
            y = gamma * (h3 - mu) * jax.lax.rsqrt(var + BN_EPS) + beta
            return jnp.maximum(y, 0.0).reshape(B * Tt, n)

    # (B*Tt, C*H*W) slab: time folded into the matmul M dimension.
    x = frames_ref[...].astype(jnp.float32).reshape(B * Tt, CHW)

    # ResNet-trunk stand-in: global average pool (per-channel lane reduction)
    # + linear projection, as a C-term broadcasted outer-product accumulation.
    # Lane slices are 256-wide at multiples of 256 (aligned); no weight repeat.
    feat = None
    for c in range(C):
        m_c = jnp.mean(x[:, c * HW:(c + 1) * HW], axis=-1, keepdims=True)  # (B*Tt, 1)
        term = m_c * wb_ref[c:c + 1, :]                                    # (B*Tt, FEAT)
        feat = term if feat is None else feat + term

    # fc1 -> bn1 -> relu
    h1 = jnp.dot(feat, w1_ref[...], preferred_element_type=jnp.float32) + b1_ref[...]
    h1 = bn_relu(h1, g1_ref[...], be1_ref[...])

    # fc2 -> bn2 -> relu
    h2 = jnp.dot(h1, w2_ref[...], preferred_element_type=jnp.float32) + b2_ref[...]
    h2 = bn_relu(h2, g2_ref[...], be2_ref[...])

    # fc3
    h3 = jnp.dot(h2, w3_ref[...], preferred_element_type=jnp.float32) + b3_ref[...]
    out_ref[...] = h3.reshape(B, 1, Tt, E).astype(out_ref.dtype)


@functools.partial(jax.jit, static_argnames=("time_blocks",))
def cnn_pretrained_forward(frames, params, time_blocks=1):
    """frames: (B, T, C, H, W) float32.  Returns (B, T, CNN_embed_dim) float32."""
    B, T, C, H, W = frames.shape
    (wb, w1, b1, g1, be1, w2, b2, g2, be2, w3, b3) = params
    E = w3.shape[1]
    HW = H * W
    CHW = C * HW

    # GT time-blocks (grid steps).  Default 1: on single-TC v5e/v6e extra grid
    # steps are pure overhead and halve the matmul M dim.  time_blocks=2 is the
    # v7x 2-TensorCore option (benchmark both; keep the lower min wall time).
    GT = time_blocks if (time_blocks > 0 and T % time_blocks == 0) else 1
    Tt = T // GT

    # Free, contiguous reshape: (B, T, C, H, W) -> (B, GT, Tt, C*H*W).
    frames_r = frames.reshape(B, GT, Tt, CHW)

    # Weights are full-block with a constant index map (never re-DMAed).
    weights = (wb, w1, b1, g1, be1, w2, b2, g2, be2, w3, b3)
    weight_specs = [
        pl.BlockSpec(w.shape, lambda g, _n=w.ndim: (0,) * _n) for w in weights
    ]

    out = pl.pallas_call(
        functools.partial(cnn_pretrained_kernel, C=C, HW=HW),
        out_shape=jax.ShapeDtypeStruct((B, GT, Tt, E), jnp.float32),
        grid_spec=pltpu.PrefetchScalarGridSpec(
            num_scalar_prefetch=0,
            grid=(GT,),
            in_specs=[pl.BlockSpec((B, 1, Tt, CHW), lambda g: (0, g, 0, 0))]
            + weight_specs,
            out_specs=pl.BlockSpec((B, 1, Tt, E), lambda g: (0, g, 0, 0)),
        ),
        compiler_params=pltpu.CompilerParams(
            dimension_semantics=("parallel",)),
    )(frames_r, *weights)

    # Free reshape back to the PyTorch layout (B, T, E): time index = g*Tt + tt.
    return out.reshape(B, T, E)


def init_params(key, C, FEAT, H1, H2, E):
    ks = jax.random.split(key, 4)
    wb = jax.random.normal(ks[0], (C, FEAT), jnp.float32) / jnp.sqrt(C)
    w1 = jax.random.normal(ks[1], (FEAT, H1), jnp.float32) / jnp.sqrt(FEAT)
    b1 = jnp.zeros((1, H1), jnp.float32)
    g1 = jnp.ones((1, H1), jnp.float32)    # bn1 weight
    be1 = jnp.zeros((1, H1), jnp.float32)  # bn1 bias
    w2 = jax.random.normal(ks[2], (H1, H2), jnp.float32) / jnp.sqrt(H1)
    b2 = jnp.zeros((1, H2), jnp.float32)
    g2 = jnp.ones((1, H2), jnp.float32)
    be2 = jnp.zeros((1, H2), jnp.float32)
    w3 = jax.random.normal(ks[3], (H2, E), jnp.float32) / jnp.sqrt(H2)
    b3 = jnp.zeros((1, E), jnp.float32)
    return (wb, w1, b1, g1, be1, w2, b2, g2, be2, w3, b3)


def _bn_train_ref(h, gamma, beta):
    mu = jnp.mean(h, axis=0, keepdims=True)
    var = jnp.mean((h - mu) ** 2, axis=0, keepdims=True)
    return gamma * (h - mu) * jax.lax.rsqrt(var + BN_EPS) + beta


def reference_forward(frames, params):
    """Pure-JAX reference mirroring the PyTorch per-timestep loop."""
    (wb, w1, b1, g1, be1, w2, b2, g2, be2, w3, b3) = params
    B, T = frames.shape[:2]
    outs = []
    for t in range(T):
        feat = jnp.mean(frames[:, t], axis=(2, 3)) @ wb
        h1 = feat @ w1 + b1
        h1 = jnp.maximum(_bn_train_ref(h1, g1, be1), 0.0)
        h2 = h1 @ w2 + b2
        h2 = jnp.maximum(_bn_train_ref(h2, g2, be2), 0.0)
        outs.append(h2 @ w3 + b3)
    return jnp.transpose(jnp.stack(outs, axis=0), (1, 0, 2))


if __name__ == "__main__":
    # Small shapes consistent with the module's forward:
    #   batch=2, seq=8, channels=4, spatial=16x16,
    #   FEAT(stand-in for 2048)=64, fc_hidden1=64, fc_hidden2=32, CNN_embed_dim=32.
    B, T, C, H, W = 2, 8, 4, 16, 16
    FEAT, H1, H2, E = 64, 64, 32, 32

    key = jax.random.PRNGKey(0)
    k_x, k_p = jax.random.split(key)
    frames = jax.random.normal(k_x, (B, T, C, H, W), jnp.float32)
    params = init_params(k_p, C, FEAT, H1, H2, E)

    ref = jax.block_until_ready(reference_forward(frames, params))

    # Default path: GT=1 (single grid step, M = B*T) — best on v5e/v6e.
    out = jax.block_until_ready(cnn_pretrained_forward(frames, params))
    assert out.shape == (B, T, E), out.shape
    max_err = float(jnp.max(jnp.abs(out - ref)))
    assert max_err < 1e-3, max_err

    # v7x option: GT=2 shards the two time-blocks across the two TensorCores.
    out2 = jax.block_until_ready(
        cnn_pretrained_forward(frames, params, time_blocks=2))
    max_err2 = float(jnp.max(jnp.abs(out2 - ref)))
    assert max_err2 < 1e-3, max_err2

    print("KERNEL_OK")
</pallas_src>

<mosaic_0001>
module attributes {stable_mosaic.version = 11 : i64} {
  func.func @cnn_pretrained_kernel(%arg0: i32, %arg1: memref<2x1x8x1024xf32, #tpu.memory_space<vmem>>, %arg2: memref<4x64xf32, #tpu.memory_space<vmem>>, %arg3: memref<64x64xf32, #tpu.memory_space<vmem>>, %arg4: memref<1x64xf32, #tpu.memory_space<vmem>>, %arg5: memref<1x64xf32, #tpu.memory_space<vmem>>, %arg6: memref<1x64xf32, #tpu.memory_space<vmem>>, %arg7: memref<64x32xf32, #tpu.memory_space<vmem>>, %arg8: memref<1x32xf32, #tpu.memory_space<vmem>>, %arg9: memref<1x32xf32, #tpu.memory_space<vmem>>, %arg10: memref<1x32xf32, #tpu.memory_space<vmem>>, %arg11: memref<32x32xf32, #tpu.memory_space<vmem>>, %arg12: memref<1x32xf32, #tpu.memory_space<vmem>>, %arg13: memref<2x1x8x32xf32, #tpu.memory_space<vmem>>) attributes {dimension_semantics = [#tpu.dimension_semantics<parallel>], iteration_bounds = array<i64: 1>, scalar_prefetch = 0 : i64, scratch_operands = 0 : i64, tpu.core_type = #tpu.core_type<tc>, window_params = [{transform_indices = @transform_0, window_bounds = array<i64: 2, 1, 8, 1024>}, {pipeline_mode = #tpu.pipeline_mode<synchronous>, transform_indices = @transform_1, window_bounds = array<i64: 4, 64>}, {pipeline_mode = #tpu.pipeline_mode<synchronous>, transform_indices = @transform_2, window_bounds = array<i64: 64, 64>}, {pipeline_mode = #tpu.pipeline_mode<synchronous>, transform_indices = @transform_3, window_bounds = array<i64: 1, 64>}, {pipeline_mode = #tpu.pipeline_mode<synchronous>, transform_indices = @transform_4, window_bounds = array<i64: 1, 64>}, {pipeline_mode = #tpu.pipeline_mode<synchronous>, transform_indices = @transform_5, window_bounds = array<i64: 1, 64>}, {pipeline_mode = #tpu.pipeline_mode<synchronous>, transform_indices = @transform_6, window_bounds = array<i64: 64, 32>}, {pipeline_mode = #tpu.pipeline_mode<synchronous>, transform_indices = @transform_7, window_bounds = array<i64: 1, 32>}, {pipeline_mode = #tpu.pipeline_mode<synchronous>, transform_indices = @transform_8, window_bounds = array<i64: 1, 32>}, {pipeline_mode = #tpu.pipeline_mode<synchronous>, transform_indices = @transform_9, window_bounds = array<i64: 1, 32>}, {pipeline_mode = #tpu.pipeline_mode<synchronous>, transform_indices = @transform_10, window_bounds = array<i64: 32, 32>}, {pipeline_mode = #tpu.pipeline_mode<synchronous>, transform_indices = @transform_11, window_bounds = array<i64: 1, 32>}, {transform_indices = @transform_12, window_bounds = array<i64: 2, 1, 8, 32>}]} {
    %c0 = arith.constant 0 : index
    %c0_0 = arith.constant 0 : index
    %c0_1 = arith.constant 0 : index
    %c0_2 = arith.constant 0 : index
    %0 = vector.load %arg1[%c0, %c0_0, %c0_1, %c0_2] : memref<2x1x8x1024xf32, #tpu.memory_space<vmem>>, vector<2x1x8x1024xf32>
    %1 = vector.shape_cast %0 : vector<2x1x8x1024xf32> to vector<16x1024xf32>
    %2 = vector.extract_strided_slice %1 {offsets = [0, 0], sizes = [16, 256], strides = [1, 1]} : vector<16x1024xf32> to vector<16x256xf32>
    %cst = arith.constant dense<0.000000e+00> : vector<16xf32>
    %3 = vector.multi_reduction <add>, %2, %cst [1] : vector<16x256xf32> to vector<16xf32>
    %4 = vector.shape_cast %3 : vector<16xf32> to vector<16x1xf32>
    %cst_3 = arith.constant 2.560000e+02 : f32
    %5 = vector.broadcast %cst_3 : f32 to vector<16x1xf32>
    %6 = arith.divf %4, %5 : vector<16x1xf32>
    %c0_4 = arith.constant 0 : index
    %c0_5 = arith.constant 0 : index
    %7 = vector.load %arg2[%c0_4, %c0_5] : memref<4x64xf32, #tpu.memory_space<vmem>>, vector<1x64xf32>
    %8 = vector.broadcast %6 : vector<16x1xf32> to vector<16x64xf32>
    %9 = vector.broadcast %7 : vector<1x64xf32> to vector<16x64xf32>
    %10 = arith.mulf %8, %9 : vector<16x64xf32>
    %11 = vector.extract_strided_slice %1 {offsets = [0, 256], sizes = [16, 256], strides = [1, 1]} : vector<16x1024xf32> to vector<16x256xf32>
    %cst_6 = arith.constant dense<0.000000e+00> : vector<16xf32>
    %12 = vector.multi_reduction <add>, %11, %cst_6 [1] : vector<16x256xf32> to vector<16xf32>
    %13 = vector.shape_cast %12 : vector<16xf32> to vector<16x1xf32>
    %cst_7 = arith.constant 2.560000e+02 : f32
    %14 = vector.broadcast %cst_7 : f32 to vector<16x1xf32>
    %15 = arith.divf %13, %14 : vector<16x1xf32>
    %c1 = arith.constant 1 : index
    %c0_8 = arith.constant 0 : index
    %16 = vector.load %arg2[%c1, %c0_8] : memref<4x64xf32, #tpu.memory_space<vmem>>, vector<1x64xf32>
    %17 = vector.broadcast %15 : vector<16x1xf32> to vector<16x64xf32>
    %18 = vector.broadcast %16 : vector<1x64xf32> to vector<16x64xf32>
    %19 = arith.mulf %17, %18 : vector<16x64xf32>
    %20 = arith.addf %10, %19 : vector<16x64xf32>
    %21 = vector.extract_strided_slice %1 {offsets = [0, 512], sizes = [16, 256], strides = [1, 1]} : vector<16x1024xf32> to vector<16x256xf32>
    %cst_9 = arith.constant dense<0.000000e+00> : vector<16xf32>
    %22 = vector.multi_reduction <add>, %21, %cst_9 [1] : vector<16x256xf32> to vector<16xf32>
    %23 = vector.shape_cast %22 : vector<16xf32> to vector<16x1xf32>
    %cst_10 = arith.constant 2.560000e+02 : f32
    %24 = vector.broadcast %cst_10 : f32 to vector<16x1xf32>
    %25 = arith.divf %23, %24 : vector<16x1xf32>
    %c2 = arith.constant 2 : index
    %c0_11 = arith.constant 0 : index
    %26 = vector.load %arg2[%c2, %c0_11] : memref<4x64xf32, #tpu.memory_space<vmem>>, vector<1x64xf32>
    %27 = vector.broadcast %25 : vector<16x1xf32> to vector<16x64xf32>
    %28 = vector.broadcast %26 : vector<1x64xf32> to vector<16x64xf32>
    %29 = arith.mulf %27, %28 : vector<16x64xf32>
    %30 = arith.addf %20, %29 : vector<16x64xf32>
    %31 = vector.extract_strided_slice %1 {offsets = [0, 768], sizes = [16, 256], strides = [1, 1]} : vector<16x1024xf32> to vector<16x256xf32>
    %cst_12 = arith.constant dense<0.000000e+00> : vector<16xf32>
    %32 = vector.multi_reduction <add>, %31, %cst_12 [1] : vector<16x256xf32> to vector<16xf32>
    %33 = vector.shape_cast %32 : vector<16xf32> to vector<16x1xf32>
    %cst_13 = arith.constant 2.560000e+02 : f32
    %34 = vector.broadcast %cst_13 : f32 to vector<16x1xf32>
    %35 = arith.divf %33, %34 : vector<16x1xf32>
    %c3 = arith.constant 3 : index
    %c0_14 = arith.constant 0 : index
    %36 = vector.load %arg2[%c3, %c0_14] : memref<4x64xf32, #tpu.memory_space<vmem>>, vector<1x64xf32>
    %37 = vector.broadcast %35 : vector<16x1xf32> to vector<16x64xf32>
    %38 = vector.broadcast %36 : vector<1x64xf32> to vector<16x64xf32>
    %39 = arith.mulf %37, %38 : vector<16x64xf32>
    %40 = arith.addf %30, %39 : vector<16x64xf32>
    %c0_15 = arith.constant 0 : index
    %c0_16 = arith.constant 0 : index
    %41 = vector.load %arg3[%c0_15, %c0_16] : memref<64x64xf32, #tpu.memory_space<vmem>>, vector<64x64xf32>
    %cst_17 = arith.constant dense<0.000000e+00> : vector<16x64xf32>
    %42 = tpu.matmul %40, %41, %cst_17 {dimension_numbers = #tpu.dot_dimension_numbers<[1], [0], [0], [1], [0, 0, 1, 1], [], []>} : vector<16x64xf32>, vector<64x64xf32>, vector<16x64xf32> -> vector<16x64xf32>
    %c0_18 = arith.constant 0 : index
    %c0_19 = arith.constant 0 : index
    %43 = vector.load %arg4[%c0_18, %c0_19] : memref<1x64xf32, #tpu.memory_space<vmem>>, vector<1x64xf32>
    %44 = vector.broadcast %43 : vector<1x64xf32> to vector<16x64xf32>
    %45 = arith.addf %42, %44 : vector<16x64xf32>
    %c0_20 = arith.constant 0 : index
    %c0_21 = arith.constant 0 : index
    %46 = vector.load %arg5[%c0_20, %c0_21] : memref<1x64xf32, #tpu.memory_space<vmem>>, vector<1x64xf32>
    %c0_22 = arith.constant 0 : index
    %c0_23 = arith.constant 0 : index
    %47 = vector.load %arg6[%c0_22, %c0_23] : memref<1x64xf32, #tpu.memory_space<vmem>>, vector<1x64xf32>
    %48 = vector.extract_strided_slice %45 {offsets = [0, 0], sizes = [8, 64], strides = [1, 1]} : vector<16x64xf32> to vector<8x64xf32>
    %49 = vector.extract_strided_slice %45 {offsets = [8, 0], sizes = [8, 64], strides = [1, 1]} : vector<16x64xf32> to vector<8x64xf32>
    %cst_24 = arith.constant 0.000000e+00 : f32
    %50 = vector.broadcast %cst_24 : f32 to vector<8x64xf32>
    %51 = arith.addf %50, %48 : vector<8x64xf32>
    %52 = arith.addf %51, %49 : vector<8x64xf32>
    %cst_25 = arith.constant 2.000000e+00 : f32
    %53 = vector.broadcast %cst_25 : f32 to vector<8x64xf32>
    %54 = arith.divf %52, %53 : vector<8x64xf32>
    %55 = arith.subf %48, %54 : vector<8x64xf32>
    %56 = arith.mulf %55, %55 : vector<8x64xf32>
    %cst_26 = arith.constant 0.000000e+00 : f32
    %57 = vector.broadcast %cst_26 : f32 to vector<8x64xf32>
    %58 = arith.addf %57, %56 : vector<8x64xf32>
    %59 = arith.subf %49, %54 : vector<8x64xf32>
    %60 = arith.mulf %59, %59 : vector<8x64xf32>
    %61 = arith.addf %58, %60 : vector<8x64xf32>
    %cst_27 = arith.constant 2.000000e+00 : f32
    %62 = vector.broadcast %cst_27 : f32 to vector<8x64xf32>
    %63 = arith.divf %61, %62 : vector<8x64xf32>
    %cst_28 = arith.constant 9.99999974E-6 : f32
    %64 = vector.broadcast %cst_28 : f32 to vector<8x64xf32>
    %65 = arith.addf %63, %64 : vector<8x64xf32>
    %66 = math.rsqrt %65 : vector<8x64xf32>
    %67 = vector.broadcast %46 : vector<1x64xf32> to vector<8x64xf32>
    %68 = arith.mulf %67, %66 : vector<8x64xf32>
    %69 = arith.mulf %54, %68 : vector<8x64xf32>
    %70 = vector.broadcast %47 : vector<1x64xf32> to vector<8x64xf32>
    %71 = arith.subf %70, %69 : vector<8x64xf32>
    %72 = arith.mulf %48, %68 : vector<8x64xf32>
    %73 = arith.addf %72, %71 : vector<8x64xf32>
    %cst_29 = arith.constant 0.000000e+00 : f32
    %74 = vector.broadcast %cst_29 : f32 to vector<8x64xf32>
    %75 = arith.maximumf %73, %74 : vector<8x64xf32>
    %76 = arith.mulf %49, %68 : vector<8x64xf32>
    %77 = arith.addf %76, %71 : vector<8x64xf32>
    %cst_30 = arith.constant 0.000000e+00 : f32
    %78 = vector.broadcast %cst_30 : f32 to vector<8x64xf32>
    %79 = arith.maximumf %77, %78 : vector<8x64xf32>
    %80 = tpu.concatenate %75, %79 in 0 : vector<8x64xf32>, vector<8x64xf32> -> vector<16x64xf32>
    %c0_31 = arith.constant 0 : index
    %c0_32 = arith.constant 0 : index
    %81 = vector.load %arg7[%c0_31, %c0_32] : memref<64x32xf32, #tpu.memory_space<vmem>>, vector<64x32xf32>
    %cst_33 = arith.constant dense<0.000000e+00> : vector<16x32xf32>
    %82 = tpu.matmul %80, %81, %cst_33 {dimension_numbers = #tpu.dot_dimension_numbers<[1], [0], [0], [1], [0, 0, 1, 1], [], []>} : vector<16x64xf32>, vector<64x32xf32>, vector<16x32xf32> -> vector<16x32xf32>
    %c0_34 = arith.constant 0 : index
    %c0_35 = arith.constant 0 : index
    %83 = vector.load %arg8[%c0_34, %c0_35] : memref<1x32xf32, #tpu.memory_space<vmem>>, vector<1x32xf32>
    %84 = vector.broadcast %83 : vector<1x32xf32> to vector<16x32xf32>
    %85 = arith.addf %82, %84 : vector<16x32xf32>
    %c0_36 = arith.constant 0 : index
    %c0_37 = arith.constant 0 : index
    %86 = vector.load %arg9[%c0_36, %c0_37] : memref<1x32xf32, #tpu.memory_space<vmem>>, vector<1x32xf32>
    %c0_38 = arith.constant 0 : index
    %c0_39 = arith.constant 0 : index
    %87 = vector.load %arg10[%c0_38, %c0_39] : memref<1x32xf32, #tpu.memory_space<vmem>>, vector<1x32xf32>
    %88 = vector.extract_strided_slice %85 {offsets = [0, 0], sizes = [8, 32], strides = [1, 1]} : vector<16x32xf32> to vector<8x32xf32>
    %89 = vector.extract_strided_slice %85 {offsets = [8, 0], sizes = [8, 32], strides = [1, 1]} : vector<16x32xf32> to vector<8x32xf32>
    %cst_40 = arith.constant 0.000000e+00 : f32
    %90 = vector.broadcast %cst_40 : f32 to vector<8x32xf32>
    %91 = arith.addf %90, %88 : vector<8x32xf32>
    %92 = arith.addf %91, %89 : vector<8x32xf32>
    %cst_41 = arith.constant 2.000000e+00 : f32
    %93 = vector.broadcast %cst_41 : f32 to vector<8x32xf32>
    %94 = arith.divf %92, %93 : vector<8x32xf32>
    %95 = arith.subf %88, %94 : vector<8x32xf32>
    %96 = arith.mulf %95, %95 : vector<8x32xf32>
    %cst_42 = arith.constant 0.000000e+00 : f32
    %97 = vector.broadcast %cst_42 : f32 to vector<8x32xf32>
    %98 = arith.addf %97, %96 : vector<8x32xf32>
    %99 = arith.subf %89, %94 : vector<8x32xf32>
    %100 = arith.mulf %99, %99 : vector<8x32xf32>
    %101 = arith.addf %98, %100 : vector<8x32xf32>
    %cst_43 = arith.constant 2.000000e+00 : f32
    %102 = vector.broadcast %cst_43 : f32 to vector<8x32xf32>
    %103 = arith.divf %101, %102 : vector<8x32xf32>
    %cst_44 = arith.constant 9.99999974E-6 : f32
    %104 = vector.broadcast %cst_44 : f32 to vector<8x32xf32>
    %105 = arith.addf %103, %104 : vector<8x32xf32>
    %106 = math.rsqrt %105 : vector<8x32xf32>
    %107 = vector.broadcast %86 : vector<1x32xf32> to vector<8x32xf32>
    %108 = arith.mulf %107, %106 : vector<8x32xf32>
    %109 = arith.mulf %94, %108 : vector<8x32xf32>
    %110 = vector.broadcast %87 : vector<1x32xf32> to vector<8x32xf32>
    %111 = arith.subf %110, %109 : vector<8x32xf32>
    %112 = arith.mulf %88, %108 : vector<8x32xf32>
    %113 = arith.addf %112, %111 : vector<8x32xf32>
    %cst_45 = arith.constant 0.000000e+00 : f32
    %114 = vector.broadcast %cst_45 : f32 to vector<8x32xf32>
    %115 = arith.maximumf %113, %114 : vector<8x32xf32>
    %116 = arith.mulf %89, %108 : vector<8x32xf32>
    %117 = arith.addf %116, %111 : vector<8x32xf32>
    %cst_46 = arith.constant 0.000000e+00 : f32
    %118 = vector.broadcast %cst_46 : f32 to vector<8x32xf32>
    %119 = arith.maximumf %117, %118 : vector<8x32xf32>
    %120 = tpu.concatenate %115, %119 in 0 : vector<8x32xf32>, vector<8x32xf32> -> vector<16x32xf32>
    %c0_47 = arith.constant 0 : index
    %c0_48 = arith.constant 0 : index
    %121 = vector.load %arg11[%c0_47, %c0_48] : memref<32x32xf32, #tpu.memory_space<vmem>>, vector<32x32xf32>
    %cst_49 = arith.constant dense<0.000000e+00> : vector<16x32xf32>
    %122 = tpu.matmul %120, %121, %cst_49 {dimension_numbers = #tpu.dot_dimension_numbers<[1], [0], [0], [1], [0, 0, 1, 1], [], []>} : vector<16x32xf32>, vector<32x32xf32>, vector<16x32xf32> -> vector<16x32xf32>
    %c0_50 = arith.constant 0 : index
    %c0_51 = arith.constant 0 : index
    %123 = vector.load %arg12[%c0_50, %c0_51] : memref<1x32xf32, #tpu.memory_space<vmem>>, vector<1x32xf32>
    %124 = vector.broadcast %123 : vector<1x32xf32> to vector<16x32xf32>
    %125 = arith.addf %122, %124 : vector<16x32xf32>
    %126 = vector.shape_cast %125 : vector<16x32xf32> to vector<2x1x8x32xf32>
    %c0_52 = arith.constant 0 : index
    %c0_53 = arith.constant 0 : index
    %c0_54 = arith.constant 0 : index
    %c0_55 = arith.constant 0 : index
    %127 = vector.load %arg13[%c0_52, %c0_53, %c0_54, %c0_55] : memref<2x1x8x32xf32, #tpu.memory_space<vmem>>, vector<2x1x8x32xf32>
    tpu.vector_store %arg13[%c0_52, %c0_53, %c0_54, %c0_55], %126 {strides = array<i32>} : memref<2x1x8x32xf32, #tpu.memory_space<vmem>>, vector<2x1x8x32xf32>,
    return
  }
  func.func @transform_0(%arg0: i32) -> (i32, i32, i32, i32) {
    %c0_i32 = arith.constant 0 : i32
    %c0_i32_0 = arith.constant 0 : i32
    %c0_i32_1 = arith.constant 0 : i32
    %c0_i32_2 = arith.constant 0 : i32
    return %c0_i32, %arg0, %c0_i32_0, %c0_i32_1 : i32, i32, i32, i32
  }
  func.func @transform_1(%arg0: i32) -> (i32, i32) {
    %c0_i32 = arith.constant 0 : i32
    %c0_i32_0 = arith.constant 0 : i32
    %c0_i32_1 = arith.constant 0 : i32
    return %c0_i32, %c0_i32_0 : i32, i32
  }
  func.func @transform_2(%arg0: i32) -> (i32, i32) {
    %c0_i32 = arith.constant 0 : i32
    %c0_i32_0 = arith.constant 0 : i32
    %c0_i32_1 = arith.constant 0 : i32
    return %c0_i32, %c0_i32_0 : i32, i32
  }
  func.func @transform_3(%arg0: i32) -> (i32, i32) {
    %c0_i32 = arith.constant 0 : i32
    %c0_i32_0 = arith.constant 0 : i32
    %c0_i32_1 = arith.constant 0 : i32
    return %c0_i32, %c0_i32_0 : i32, i32
  }
  func.func @transform_4(%arg0: i32) -> (i32, i32) {
    %c0_i32 = arith.constant 0 : i32
    %c0_i32_0 = arith.constant 0 : i32
    %c0_i32_1 = arith.constant 0 : i32
    return %c0_i32, %c0_i32_0 : i32, i32
  }
  func.func @transform_5(%arg0: i32) -> (i32, i32) {
    %c0_i32 = arith.constant 0 : i32
    %c0_i32_0 = arith.constant 0 : i32
    %c0_i32_1 = arith.constant 0 : i32
    return %c0_i32, %c0_i32_0 : i32, i32
  }
  func.func @transform_6(%arg0: i32) -> (i32, i32) {
    %c0_i32 = arith.constant 0 : i32
    %c0_i32_0 = arith.constant 0 : i32
    %c0_i32_1 = arith.constant 0 : i32
    return %c0_i32, %c0_i32_0 : i32, i32
  }
  func.func @transform_7(%arg0: i32) -> (i32, i32) {
    %c0_i32 = arith.constant 0 : i32
    %c0_i32_0 = arith.constant 0 : i32
    %c0_i32_1 = arith.constant 0 : i32
    return %c0_i32, %c0_i32_0 : i32, i32
  }
  func.func @transform_8(%arg0: i32) -> (i32, i32) {
    %c0_i32 = arith.constant 0 : i32
    %c0_i32_0 = arith.constant 0 : i32
    %c0_i32_1 = arith.constant 0 : i32
    return %c0_i32, %c0_i32_0 : i32, i32
  }
  func.func @transform_9(%arg0: i32) -> (i32, i32) {
    %c0_i32 = arith.constant 0 : i32
    %c0_i32_0 = arith.constant 0 : i32
    %c0_i32_1 = arith.constant 0 : i32
    return %c0_i32, %c0_i32_0 : i32, i32
  }
  func.func @transform_10(%arg0: i32) -> (i32, i32) {
    %c0_i32 = arith.constant 0 : i32
    %c0_i32_0 = arith.constant 0 : i32
    %c0_i32_1 = arith.constant 0 : i32
    return %c0_i32, %c0_i32_0 : i32, i32
  }
  func.func @transform_11(%arg0: i32) -> (i32, i32) {
    %c0_i32 = arith.constant 0 : i32
    %c0_i32_0 = arith.constant 0 : i32
    %c0_i32_1 = arith.constant 0 : i32
    return %c0_i32, %c0_i32_0 : i32, i32
  }
  func.func @transform_12(%arg0: i32) -> (i32, i32, i32, i32) {
    %c0_i32 = arith.constant 0 : i32
    %c0_i32_0 = arith.constant 0 : i32
    %c0_i32_1 = arith.constant 0 : i32
    %c0_i32_2 = arith.constant 0 : i32
    return %c0_i32, %arg0, %c0_i32_0, %c0_i32_1 : i32, i32, i32, i32
  }
}

</mosaic_0001>

<llo_original>
// kernel: cnn_pretrained_forward.1
$region0: #{cnn_pretrained_forward.1}
  #allocation0 [shape = 'u32[]', space=smem, size = 0x4, offset = 0x4, fixed_abs, tag = 'smem constant byte address 0x4 - core index']
  #allocation1 [shape = 'u32[144,128]{1,0:T(1,128)}', space=vmem, size = 0x12000, scoped, tag = 'internal scratch']
  %s0 = inlined_call_operand.vmem [shape: f32[2,1,8,1024], index: 0, kind: input, shape index: {}]
  %s1 = inlined_call_operand.vmem [shape: f32[4,64], index: 1, kind: input, shape index: {}]
  %s2 = inlined_call_operand.vmem [shape: f32[64,64], index: 2, kind: input, shape index: {}]
  %s3 = inlined_call_operand.vmem [shape: f32[1,64], index: 3, kind: input, shape index: {}]
  %s4 = inlined_call_operand.vmem [shape: f32[1,64], index: 4, kind: input, shape index: {}]
  %s5 = inlined_call_operand.vmem [shape: f32[1,64], index: 5, kind: input, shape index: {}]
  %s6 = inlined_call_operand.vmem [shape: f32[64,32], index: 6, kind: input, shape index: {}]
  %s7 = inlined_call_operand.vmem [shape: f32[1,32], index: 7, kind: input, shape index: {}]
  %s8 = inlined_call_operand.vmem [shape: f32[1,32], index: 8, kind: input, shape index: {}]
  %s9 = inlined_call_operand.vmem [shape: f32[1,32], index: 9, kind: input, shape index: {}]
  %s10 = inlined_call_operand.vmem [shape: f32[32,32], index: 10, kind: input, shape index: {}]
  %s11 = inlined_call_operand.vmem [shape: f32[1,32], index: 11, kind: input, shape index: {}]
  %s12 = inlined_call_operand.hbm [shape: f32[2,1,8,32], index: 12, kind: output, shape index: {}]
  %s13 = sld [smem:[#allocation0]]
  $region58: #{cnn_pretrained_forward.1} parent=0
    _
  %s15 = ssub.s32 1, %s13
  %s16 = scalar_select 0, %s15, %s13
  $region1: #{cnn_pretrained_forward.1} parent=0
    #allocation2 [shape = 'u8[8192]{0}', space=vmem, size = 0x2000, scoped, tag = 'output window, operand 0, single buffered']
    #allocation3 [shape = 's32[1]{0}', space=sflag, size = 0x4, scoped, tag = 'scoped memory for cnn_pretrained_forward.1']
    %17 = vsyncpa [#allocation3], 0
    // Predicated region
    $region2: #{cnn_pretrained_forward.1} parent=1 // pred_check
      _
    $region3: #{cnn_pretrained_forward.1} parent=1 // pred_check_branch
      %19 = sbr.rel (0) target = $region5
    $region4: #{cnn_pretrained_forward.1} parent=1 // pred_region
      _
    $region5: #{cnn_pretrained_forward.1} parent=1 // pred_fallthru
      _
    // Predicated region
    $region6: #{cnn_pretrained_forward.1} parent=1 // pred_check
      _
    $region7: #{cnn_pretrained_forward.1} parent=1 // pred_check_branch
      %21 = sbr.rel (0) target = $region9
    $region8: #{cnn_pretrained_forward.1} parent=1 // pred_region
      _
    $region9: #{cnn_pretrained_forward.1} parent=1 // pred_fallthru
      _
    // Predicated region
    $region10: #{cnn_pretrained_forward.1} parent=1 // pred_check
      _
    $region11: #{cnn_pretrained_forward.1} parent=1 // pred_check_branch
      %23 = sbr.rel (0) target = $region13
    $region12: #{cnn_pretrained_forward.1} parent=1 // pred_region
      _
    $region13: #{cnn_pretrained_forward.1} parent=1 // pred_fallthru
      _
    // Predicated region
    $region14: #{cnn_pretrained_forward.1} parent=1 // pred_check
      _
    $region15: #{cnn_pretrained_forward.1} parent=1 // pred_check_branch
      %25 = sbr.rel (0) target = $region17
    $region16: #{cnn_pretrained_forward.1} parent=1 // pred_region
      _
    $region17: #{cnn_pretrained_forward.1} parent=1 // pred_fallthru
      _
    // Predicated region
    $region18: #{cnn_pretrained_forward.1} parent=1 // pred_check
      _
    $region19: #{cnn_pretrained_forward.1} parent=1 // pred_check_branch
      %27 = sbr.rel (0) target = $region21
    $region20: #{cnn_pretrained_forward.1} parent=1 // pred_region
      _
    $region21: #{cnn_pretrained_forward.1} parent=1 // pred_fallthru
      _
    // Predicated region
    $region22: #{cnn_pretrained_forward.1} parent=1 // pred_check
      _
    $region23: #{cnn_pretrained_forward.1} parent=1 // pred_check_branch
      %29 = sbr.rel (0) target = $region25
    $region24: #{cnn_pretrained_forward.1} parent=1 // pred_region
      _
    $region25: #{cnn_pretrained_forward.1} parent=1 // pred_fallthru
      _
    // Predicated region
    $region26: #{cnn_pretrained_forward.1} parent=1 // pred_check
      _
    $region27: #{cnn_pretrained_forward.1} parent=1 // pred_check_branch
      %31 = sbr.rel (0) target = $region29
    $region28: #{cnn_pretrained_forward.1} parent=1 // pred_region
      _
    $region29: #{cnn_pretrained_forward.1} parent=1 // pred_fallthru
      _
    // Predicated region
    $region30: #{cnn_pretrained_forward.1} parent=1 // pred_check
      _
    $region31: #{cnn_pretrained_forward.1} parent=1 // pred_check_branch
      %33 = sbr.rel (0) target = $region33
    $region32: #{cnn_pretrained_forward.1} parent=1 // pred_region
      _
    $region33: #{cnn_pretrained_forward.1} parent=1 // pred_fallthru
      _
    // Predicated region
    $region34: #{cnn_pretrained_forward.1} parent=1 // pred_check
      _
    $region35: #{cnn_pretrained_forward.1} parent=1 // pred_check_branch
      %35 = sbr.rel (0) target = $region37
    $region36: #{cnn_pretrained_forward.1} parent=1 // pred_region
      _
    $region37: #{cnn_pretrained_forward.1} parent=1 // pred_fallthru
      _
    // Predicated region
    $region38: #{cnn_pretrained_forward.1} parent=1 // pred_check
      _
    $region39: #{cnn_pretrained_forward.1} parent=1 // pred_check_branch
      %37 = sbr.rel (0) target = $region41
    $region40: #{cnn_pretrained_forward.1} parent=1 // pred_region
      _
    $region41: #{cnn_pretrained_forward.1} parent=1 // pred_fallthru
      _
    // Predicated region
    $region42: #{cnn_pretrained_forward.1} parent=1 // pred_check
      _
    $region43: #{cnn_pretrained_forward.1} parent=1 // pred_check_branch
      %39 = sbr.rel (0) target = $region45
    $region44: #{cnn_pretrained_forward.1} parent=1 // pred_region
      _
    $region45: #{cnn_pretrained_forward.1} parent=1 // pred_fallthru
      _
    // Predicated region
    $region46: #{cnn_pretrained_forward.1} parent=1 // pred_check
      _
    $region47: #{cnn_pretrained_forward.1} parent=1 // pred_check_branch
      %41 = sbr.rel (0) target = $region49
    $region48: #{cnn_pretrained_forward.1} parent=1 // pred_region
      _
    $region49: #{cnn_pretrained_forward.1} parent=1 // pred_fallthru
      _
    %v42 = vld [vmem:[%s0] sm:$0xff]
    %v43 = vld [vmem:[%s0 + $0x8] sm:$0xff]
    %v44 = vld [vmem:[%s0 + $0x10] sm:$0xff]
    %v45 = vld [vmem:[%s0 + $0x18] sm:$0xff]
    %v46 = vld [vmem:[%s0 + $0x20] sm:$0xff]
    %v47 = vld [vmem:[%s0 + $0x28] sm:$0xff]
    %v48 = vld [vmem:[%s0 + $0x30] sm:$0xff]
    %v49 = vld [vmem:[%s0 + $0x38] sm:$0xff]
    %v50 = vld [vmem:[%s0 + $0x40] sm:$0xff]
    %v51 = vld [vmem:[%s0 + $0x48] sm:$0xff]
    %v52 = vld [vmem:[%s0 + $0x50] sm:$0xff]
    %v53 = vld [vmem:[%s0 + $0x58] sm:$0xff]
    %v54 = vld [vmem:[%s0 + $0x60] sm:$0xff]
    %v55 = vld [vmem:[%s0 + $0x68] sm:$0xff]
    %v56 = vld [vmem:[%s0 + $0x70] sm:$0xff]
    %v57 = vld [vmem:[%s0 + $0x78] sm:$0xff]
    %v58 = vadd.f32 %v42, %v43
    %59 = vadd.xlane.f32.xlu0 %v58
    %v60 = vpop.xlane.xlu0 %59
    %v61 = vadd.f32 %v50, %v51
    %62 = vadd.xlane.f32.xlu0 %v61
    %v63 = vpop.xlane.xlu0 %62
    %v64 = vrcp.pop 256.0
    %v65 = vmul.f32 %v60, %v64
    %v66 = vmul.f32 %v63, %v64
    %v67 = vld [vmem:[%s1] sm:$0x1]
    %v68 = vlaneseq
    %v69 = vshrl.u32 %v68, 7
    %v70 = vsub.s32 0, %v69
    %v71 = vrot.slane %v67, %v70
    %v72 = vmul.f32 %v65, %v71
    %v73 = vmul.f32 %v66, %v71
    %v74 = vadd.f32 %v44, %v45
    %75 = vadd.xlane.f32.xlu0 %v74
    %v76 = vpop.xlane.xlu0 %75
    %v77 = vadd.f32 %v52, %v53
    %78 = vadd.xlane.f32.xlu0 %v77
    %v79 = vpop.xlane.xlu0 %78
    %v80 = vmul.f32 %v76, %v64
    %v81 = vmul.f32 %v79, %v64
    %v82 = vld [vmem:[%s1 + $0x1] sm:$0x1]
    %v83 = vlaneseq
    %v84 = vshrl.u32 %v83, 7
    %v85 = vsub.s32 0, %v84
    %v86 = vrot.slane %v82, %v85
    %v87 = vmul.f32 %v80, %v86
    %v88 = vmul.f32 %v81, %v86
    %v89 = vadd.f32 %v72, %v87
    %v90 = vadd.f32 %v73, %v88
    %v91 = vadd.f32 %v46, %v47
    %92 = vadd.xlane.f32.xlu0 %v91
    %v93 = vpop.xlane.xlu0 %92
    %v94 = vadd.f32 %v54, %v55
    %95 = vadd.xlane.f32.xlu0 %v94
    %v96 = vpop.xlane.xlu0 %95
    %v97 = vmul.f32 %v93, %v64
    %v98 = vmul.f32 %v96, %v64
    %v99 = vld [vmem:[%s1 + $0x2] sm:$0x1]
    %v100 = vlaneseq
    %v101 = vshrl.u32 %v100, 7
    %v102 = vsub.s32 0, %v101
    %v103 = vrot.slane %v99, %v102
    %v104 = vmul.f32 %v97, %v103
    %v105 = vmul.f32 %v98, %v103
    %v106 = vadd.f32 %v89, %v104
    %v107 = vadd.f32 %v90, %v105
    %v108 = vadd.f32 %v48, %v49
    %109 = vadd.xlane.f32.xlu0 %v108
    %v110 = vpop.xlane.xlu0 %109
    %v111 = vadd.f32 %v56, %v57
    %112 = vadd.xlane.f32.xlu0 %v111
    %v113 = vpop.xlane.xlu0 %112
    %v114 = vmul.f32 %v110, %v64
    %v115 = vmul.f32 %v113, %v64
    %v116 = vld [vmem:[%s1 + $0x3] sm:$0x1]
    %v117 = vlaneseq
    %v118 = vshrl.u32 %v117, 7
    %v119 = vsub.s32 0, %v118
    %v120 = vrot.slane %v116, %v119
    %v121 = vmul.f32 %v114, %v120
    %v122 = vmul.f32 %v115, %v120
    %v123 = vadd.f32 %v106, %v121
    %v124 = vadd.f32 %v107, %v122
    %v125 = vld [vmem:[%s2] sm:$0xff]
    %v126 = vld [vmem:[%s2 + $0x8] sm:$0xff]
    %v127 = vld [vmem:[%s2 + $0x10] sm:$0xff]
    %v128 = vld [vmem:[%s2 + $0x18] sm:$0xff]
    %v129 = vld [vmem:[%s2 + $0x20] sm:$0xff]
    %v130 = vld [vmem:[%s2 + $0x28] sm:$0xff]
    %v131 = vld [vmem:[%s2 + $0x30] sm:$0xff]
    %v132 = vld [vmem:[%s2 + $0x38] sm:$0xff]
    %v133 = vld [vmem:[%s3] sm:$0x1]
    %v135 = vlaneseq
    %v136 = vshrl.u32 %v135, 7
    %v137 = vsub.s32 0, %v136
    %v138 = vrot.slane %v133, %v137
    %vm140 = vcmask 523264
    %v142 = vsel %vm140, %v123, 0
    %v145 = vsel %vm140, %v124, 0
    %147 = vmatprep.subr.mxu0 0.0
    %148 = vmatpush1.msra.mxu0 0.0
    %149 = vmatprep.subr.mxu0 0.0
    %150 = vmatpush1.msra.mxu0 0.0
    %151 = vmatprep.subr.mxu0 0.0
    %152 = vmatpush1.msra.mxu0 0.0
    %153 = vmatprep.subr.mxu0 0.0
    %154 = vmatpush1.msra.mxu0 0.0
    %155 = vmatprep.subr.mxu0 0.0
    %156 = vmatpush1.msra.mxu0 0.0
    %157 = vmatprep.subr.mxu0 0.0
    %158 = vmatpush1.msra.mxu0 0.0
    %159 = vmatprep.subr.mxu0 0.0
    %160 = vmatpush1.msra.mxu0 0.0
    %161 = vmatprep.subr.mxu0 0.0
    %162 = vmatpush1.msra.mxu0 0.0
    %163 = vmatprep.subr.mxu0 0.0
    %164 = vmatpush1.msra.mxu0 %v132
    %165 = vmatprep.subr.mxu0 0.0
    %166 = vmatpush1.msra.mxu0 %v131
    %167 = vmatprep.subr.mxu0 0.0
    %168 = vmatpush1.msra.mxu0 %v130
    %169 = vmatprep.subr.mxu0 0.0
    %170 = vmatpush1.msra.mxu0 %v129
    %171 = vmatprep.subr.mxu0 0.0
    %172 = vmatpush1.msra.mxu0 %v128
    %173 = vmatprep.subr.mxu0 0.0
    %174 = vmatpush1.msra.mxu0 %v127
    %175 = vmatprep.subr.mxu0 0.0
    %176 = vmatpush1.msra.mxu0 %v126
    %177 = vmatprep.subr.mxu0 0.0
    %178 = vmatpush1.msra.mxu0 %v125
    %179 = vmatprep.subr.mxu0 0.0
    %180 = vmatpush2.msra.mxu0 0.0
    %181 = vmatprep.subr.mxu0 0.0
    %182 = vmatpush2.msra.mxu0 0.0
    %183 = vmatprep.subr.mxu0 0.0
    %184 = vmatpush2.msra.mxu0 0.0
    %185 = vmatprep.subr.mxu0 0.0
    %186 = vmatpush2.msra.mxu0 0.0
    %187 = vmatprep.subr.mxu0 0.0
    %188 = vmatpush2.msra.mxu0 0.0
    %189 = vmatprep.subr.mxu0 0.0
    %190 = vmatpush2.msra.mxu0 0.0
    %191 = vmatprep.subr.mxu0 0.0
    %192 = vmatpush2.msra.mxu0 0.0
    %193 = vmatprep.subr.mxu0 0.0
    %194 = vmatpush2.msra.mxu0 0.0
    %195 = vmatprep.subr.mxu0 0.0
    %196 = vmatpush2.msra.mxu0 0.0
    %197 = vmatprep.subr.mxu0 0.0
    %198 = vmatpush2.msra.mxu0 0.0
    %199 = vmatprep.subr.mxu0 0.0
    %200 = vmatpush2.msra.mxu0 0.0
    %201 = vmatprep.subr.mxu0 0.0
    %202 = vmatpush2.msra.mxu0 0.0
    %203 = vmatprep.subr.mxu0 0.0
    %204 = vmatpush2.msra.mxu0 0.0
    %205 = vmatprep.subr.mxu0 0.0
    %206 = vmatpush2.msra.mxu0 0.0
    %207 = vmatprep.subr.mxu0 0.0
    %208 = vmatpush2.msra.mxu0 0.0
    %209 = vmatprep.subr.mxu0 0.0
    %210 = vmatpush2.msra.mxu0 0.0
    %211 = vmatprep.mubr.f32.mxu0 0.0
    %212 = vmatmul.mubr.f32.gmra.mxu0 %v142
    %v213 = vpop.f32.mrf.mxu0
    %v214 = vadd.f32 %v138, %v213
    %v215 = vpop.f32.mrf.mxu0
    %216 = vmatprep.mubr.f32.mxu0 0.0
    %217 = vmatmul.mubr.f32.gmra.mxu0 %v145
    %v218 = vpop.f32.mrf.mxu0
    %v219 = vadd.f32 %v138, %v218
    %v220 = vpop.f32.mrf.mxu0
    %221 = vdwg.mxu0
    %v222 = vld [vmem:[%s4] sm:$0x1]
    %v223 = vld [vmem:[%s5] sm:$0x1]
    %v224 = vadd.f32 %v214, 0.0
    %v225 = vadd.f32 %v224, %v219
    %v226 = vrcp.pop 2.0
    %v227 = vmul.f32 %v225, %v226
    %v228 = vsub.f32 %v214, %v227
    %v229 = vmul.f32 %v228, %v228
    %v230 = vadd.f32 %v229, 0.0
    %v231 = vsub.f32 %v219, %v227
    %v232 = vmul.f32 %v231, %v231
    %v233 = vadd.f32 %v230, %v232
    %v234 = vmul.f32 %v233, %v226
    %v235 = vadd.f32 %v234, 1e-05
    %v236 = vrsqrt.pop %v235
    %v238 = vlaneseq
    %v239 = vshrl.u32 %v238, 7
    %v240 = vsub.s32 0, %v239
    %v241 = vrot.slane %v222, %v240
    %v243 = vmul.f32 %v241, %v236
    %v244 = vmul.f32 %v227, %v243
    %v246 = vlaneseq
    %v247 = vshrl.u32 %v246, 7
    %v248 = vsub.s32 0, %v247
    %v249 = vrot.slane %v223, %v248
    %v251 = vsub.f32 %v249, %v244
    %v252 = vmul.f32 %v214, %v243
    %v253 = vadd.f32 %v252, %v251
    %v254 = vmax.f32 %v253, 0.0
    %v255 = vmul.f32 %v219, %v243
    %v256 = vadd.f32 %v255, %v251
    %v257 = vmax.f32 %v256, 0.0
    %v258 = vld [vmem:[%s6] sm:$0xff]
    %v259 = vld [vmem:[%s6 + $0x8] sm:$0xff]
    %v260 = vld [vmem:[%s6 + $0x10] sm:$0xff]
    %v261 = vld [vmem:[%s6 + $0x18] sm:$0xff]
    %v262 = vld [vmem:[%s6 + $0x20] sm:$0xff]
    %v263 = vld [vmem:[%s6 + $0x28] sm:$0xff]
    %v264 = vld [vmem:[%s6 + $0x30] sm:$0xff]
    %v265 = vld [vmem:[%s6 + $0x38] sm:$0xff]
    %v266 = vld [vmem:[%s7] sm:$0x1]
    %v268 = vlaneseq
    %v269 = vshrl.u32 %v268, 7
    %v270 = vsub.s32 0, %v269
    %v271 = vrot.slane %v266, %v270
    %v274 = vsel %vm140, %v254, 0
    %v277 = vsel %vm140, %v257, 0
    %279 = vmatprep.subr.mxu0 0.0
    %280 = vmatpush1.msra.mxu0 0.0
    %281 = vmatprep.subr.mxu0 0.0
    %282 = vmatpush1.msra.mxu0 0.0
    %283 = vmatprep.subr.mxu0 0.0
    %284 = vmatpush1.msra.mxu0 0.0
    %285 = vmatprep.subr.mxu0 0.0
    %286 = vmatpush1.msra.mxu0 0.0
    %287 = vmatprep.subr.mxu0 0.0
    %288 = vmatpush1.msra.mxu0 0.0
    %289 = vmatprep.subr.mxu0 0.0
    %290 = vmatpush1.msra.mxu0 0.0
    %291 = vmatprep.subr.mxu0 0.0
    %292 = vmatpush1.msra.mxu0 0.0
    %293 = vmatprep.subr.mxu0 0.0
    %294 = vmatpush1.msra.mxu0 0.0
    %295 = vmatprep.subr.mxu0 0.0
    %296 = vmatpush1.msra.mxu0 %v265
    %297 = vmatprep.subr.mxu0 0.0
    %298 = vmatpush1.msra.mxu0 %v264
    %299 = vmatprep.subr.mxu0 0.0
    %300 = vmatpush1.msra.mxu0 %v263
    %301 = vmatprep.subr.mxu0 0.0
    %302 = vmatpush1.msra.mxu0 %v262
    %303 = vmatprep.subr.mxu0 0.0
    %304 = vmatpush1.msra.mxu0 %v261
    %305 = vmatprep.subr.mxu0 0.0
    %306 = vmatpush1.msra.mxu0 %v260
    %307 = vmatprep.subr.mxu0 0.0
    %308 = vmatpush1.msra.mxu0 %v259
    %309 = vmatprep.subr.mxu0 0.0
    %310 = vmatpush1.msra.mxu0 %v258
    %311 = vmatprep.subr.mxu0 0.0
    %312 = vmatpush2.msra.mxu0 0.0
    %313 = vmatprep.subr.mxu0 0.0
    %314 = vmatpush2.msra.mxu0 0.0
    %315 = vmatprep.subr.mxu0 0.0
    %316 = vmatpush2.msra.mxu0 0.0
    %317 = vmatprep.subr.mxu0 0.0
    %318 = vmatpush2.msra.mxu0 0.0
    %319 = vmatprep.subr.mxu0 0.0
    %320 = vmatpush2.msra.mxu0 0.0
    %321 = vmatprep.subr.mxu0 0.0
    %322 = vmatpush2.msra.mxu0 0.0
    %323 = vmatprep.subr.mxu0 0.0
    %324 = vmatpush2.msra.mxu0 0.0
    %325 = vmatprep.subr.mxu0 0.0
    %326 = vmatpush2.msra.mxu0 0.0
    %327 = vmatprep.subr.mxu0 0.0
    %328 = vmatpush2.msra.mxu0 0.0
    %329 = vmatprep.subr.mxu0 0.0
    %330 = vmatpush2.msra.mxu0 0.0
    %331 = vmatprep.subr.mxu0 0.0
    %332 = vmatpush2.msra.mxu0 0.0
    %333 = vmatprep.subr.mxu0 0.0
    %334 = vmatpush2.msra.mxu0 0.0
    %335 = vmatprep.subr.mxu0 0.0
    %336 = vmatpush2.msra.mxu0 0.0
    %337 = vmatprep.subr.mxu0 0.0
    %338 = vmatpush2.msra.mxu0 0.0
    %339 = vmatprep.subr.mxu0 0.0
    %340 = vmatpush2.msra.mxu0 0.0
    %341 = vmatprep.subr.mxu0 0.0
    %342 = vmatpush2.msra.mxu0 0.0
    %343 = vmatprep.mubr.f32.mxu0 0.0
    %344 = vmatmul.mubr.f32.gmra.mxu0 %v274
    %v345 = vpop.f32.mrf.mxu0
    %v346 = vadd.f32 %v271, %v345
    %v347 = vpop.f32.mrf.mxu0
    %348 = vmatprep.mubr.f32.mxu0 0.0
    %349 = vmatmul.mubr.f32.gmra.mxu0 %v277
    %v350 = vpop.f32.mrf.mxu0
    %v351 = vadd.f32 %v271, %v350
    %v352 = vpop.f32.mrf.mxu0
    %353 = vdwg.mxu0
    %v354 = vld [vmem:[%s8] sm:$0x1]
    %v355 = vld [vmem:[%s9] sm:$0x1]
    %v356 = vadd.f32 %v346, 0.0
    %v357 = vadd.f32 %v356, %v351
    %v358 = vmul.f32 %v357, %v226
    %v359 = vsub.f32 %v346, %v358
    %v360 = vmul.f32 %v359, %v359
    %v361 = vadd.f32 %v360, 0.0
    %v362 = vsub.f32 %v351, %v358
    %v363 = vmul.f32 %v362, %v362
    %v364 = vadd.f32 %v361, %v363
    %v365 = vmul.f32 %v364, %v226
    %v366 = vadd.f32 %v365, 1e-05
    %v367 = vrsqrt.pop %v366
    %v369 = vlaneseq
    %v370 = vshrl.u32 %v369, 7
    %v371 = vsub.s32 0, %v370
    %v372 = vrot.slane %v354, %v371
    %v374 = vmul.f32 %v372, %v367
    %v375 = vmul.f32 %v358, %v374
    %v377 = vlaneseq
    %v378 = vshrl.u32 %v377, 7
    %v379 = vsub.s32 0, %v378
    %v380 = vrot.slane %v355, %v379
    %v382 = vsub.f32 %v380, %v375
    %v383 = vmul.f32 %v346, %v374
    %v384 = vadd.f32 %v383, %v382
    %v385 = vmax.f32 %v384, 0.0
    %v386 = vmul.f32 %v351, %v374
    %v387 = vadd.f32 %v386, %v382
    %v388 = vmax.f32 %v387, 0.0
    %v389 = vld [vmem:[%s10] sm:$0xff]
    %v390 = vld [vmem:[%s10 + $0x8] sm:$0xff]
    %v391 = vld [vmem:[%s10 + $0x10] sm:$0xff]
    %v392 = vld [vmem:[%s10 + $0x18] sm:$0xff]
    %v393 = vld [vmem:[%s11] sm:$0x1]
    %v395 = vlaneseq
    %v396 = vshrl.u32 %v395, 7
    %v397 = vsub.s32 0, %v396
    %v398 = vrot.slane %v393, %v397
    %vm400 = vcmask 261120
    %v402 = vsel %vm400, %v385, 0
    %v405 = vsel %vm400, %v388, 0
    %407 = vmatprep.subr.mxu0 0.0
    %408 = vmatpush1.msra.mxu0 0.0
    %409 = vmatprep.subr.mxu0 0.0
    %410 = vmatpush1.msra.mxu0 0.0
    %411 = vmatprep.subr.mxu0 0.0
    %412 = vmatpush1.msra.mxu0 0.0
    %413 = vmatprep.subr.mxu0 0.0
    %414 = vmatpush1.msra.mxu0 0.0
    %415 = vmatprep.subr.mxu0 0.0
    %416 = vmatpush1.msra.mxu0 0.0
    %417 = vmatprep.subr.mxu0 0.0
    %418 = vmatpush1.msra.mxu0 0.0
    %419 = vmatprep.subr.mxu0 0.0
    %420 = vmatpush1.msra.mxu0 0.0
    %421 = vmatprep.subr.mxu0 0.0
    %422 = vmatpush1.msra.mxu0 0.0
    %423 = vmatprep.subr.mxu0 0.0
    %424 = vmatpush1.msra.mxu0 0.0
    %425 = vmatprep.subr.mxu0 0.0
    %426 = vmatpush1.msra.mxu0 0.0
    %427 = vmatprep.subr.mxu0 0.0
    %428 = vmatpush1.msra.mxu0 0.0
    %429 = vmatprep.subr.mxu0 0.0
    %430 = vmatpush1.msra.mxu0 0.0
    %431 = vmatprep.subr.mxu0 0.0
    %432 = vmatpush1.msra.mxu0 %v392
    %433 = vmatprep.subr.mxu0 0.0
    %434 = vmatpush1.msra.mxu0 %v391
    %435 = vmatprep.subr.mxu0 0.0
    %436 = vmatpush1.msra.mxu0 %v390
    %437 = vmatprep.subr.mxu0 0.0
    %438 = vmatpush1.msra.mxu0 %v389
    %439 = vmatprep.subr.mxu0 0.0
    %440 = vmatpush2.msra.mxu0 0.0
    %441 = vmatprep.subr.mxu0 0.0
    %442 = vmatpush2.msra.mxu0 0.0
    %443 = vmatprep.subr.mxu0 0.0
    %444 = vmatpush2.msra.mxu0 0.0
    %445 = vmatprep.subr.mxu0 0.0
    %446 = vmatpush2.msra.mxu0 0.0
    %447 = vmatprep.subr.mxu0 0.0
    %448 = vmatpush2.msra.mxu0 0.0
    %449 = vmatprep.subr.mxu0 0.0
    %450 = vmatpush2.msra.mxu0 0.0
    %451 = vmatprep.subr.mxu0 0.0
    %452 = vmatpush2.msra.mxu0 0.0
    %453 = vmatprep.subr.mxu0 0.0
    %454 = vmatpush2.msra.mxu0 0.0
    %455 = vmatprep.subr.mxu0 0.0
    %456 = vmatpush2.msra.mxu0 0.0
    %457 = vmatprep.subr.mxu0 0.0
    %458 = vmatpush2.msra.mxu0 0.0
    %459 = vmatprep.subr.mxu0 0.0
    %460 = vmatpush2.msra.mxu0 0.0
    %461 = vmatprep.subr.mxu0 0.0
    %462 = vmatpush2.msra.mxu0 0.0
    %463 = vmatprep.subr.mxu0 0.0
    %464 = vmatpush2.msra.mxu0 0.0
    %465 = vmatprep.subr.mxu0 0.0
    %466 = vmatpush2.msra.mxu0 0.0
    %467 = vmatprep.subr.mxu0 0.0
    %468 = vmatpush2.msra.mxu0 0.0
    %469 = vmatprep.subr.mxu0 0.0
    %470 = vmatpush2.msra.mxu0 0.0
    %471 = vmatprep.mubr.f32.mxu0 0.0
    %472 = vmatmul.mubr.f32.gmra.mxu0 %v402
    %v473 = vpop.f32.mrf.mxu0
    %v474 = vadd.f32 %v398, %v473
    %v475 = vpop.f32.mrf.mxu0
    %476 = vmatprep.mubr.f32.mxu0 0.0
    %477 = vmatmul.mubr.f32.gmra.mxu0 %v405
    %v478 = vpop.f32.mrf.mxu0
    %v479 = vadd.f32 %v398, %v478
    %v480 = vpop.f32.mrf.mxu0
    %481 = vdwg.mxu0
    %482 = vst.msk [vmem:[#allocation2] sm:$0xff] %vm400, %v474
    %483 = vst.msk [vmem:[#allocation2 + $0x8] sm:$0xff] %vm400, %v479
    // Predicated region
    $region50: #{cnn_pretrained_forward.1} parent=1 // pred_check
      _
    $region51: #{cnn_pretrained_forward.1} parent=1 // pred_check_branch
      %485 = sbr.rel (0) target = $region53
    $region52: #{cnn_pretrained_forward.1} parent=1 // pred_region
      %s487 = ssub.s32 256, 256
      %488 = vsyncadd [#allocation3], %s487
      %s489 = sshll.u32 [#allocation2], 4
      %s490 = int_to_ptr.vmem [resolvable:$true] %s489
      %495 = dma.vmem_to_hbm [thread:$0]  %s490, 256, %s12, [#allocation3], 128, 128, 8
    $region53: #{cnn_pretrained_forward.1} parent=1 // pred_fallthru
      _
    // Predicated region
    $region54: #{cnn_pretrained_forward.1} parent=1 // pred_check
      _
    $region55: #{cnn_pretrained_forward.1} parent=1 // pred_check_branch
      %497 = sbr.rel (0) target = $region57
    $region56: #{cnn_pretrained_forward.1} parent=1 // pred_region
      %498 = dma.done [#allocation3], 256
    $region57: #{cnn_pretrained_forward.1} parent=1 // pred_fallthru
      _
    %499 = vsyncpa [#allocation3], 1

</llo_original>
